<compile_context>
chip_gen: v7x
topology: tpu7x:2x2x1
jax: 0.10.0
libtpu: 0.0.40
codegen_flags: <defaults>
</compile_context>

<pallas_src>
import math
import numpy as np
import jax
import jax.numpy as jnp
from jax.experimental import pallas as pl
from jax.experimental.pallas import tpu as pltpu

_SUB = 8          # sublane alignment for the packed weight slab
_MXU_MIN_CH = 64  # below this channel count use the VPU outer-product path


def _rup(n, m=_SUB):
    return ((n + m - 1) // m) * m


# ---------------------------------------------------------------------------
# Kernel
# ---------------------------------------------------------------------------
def _conv_taps(slab_ref, h, tidx, *, cin, cout, k, dilation, w_row, b_row,
               tap_stride, N, T):
    """Causal dilated Conv1d(k) + Chomp + bias on (cin, N) -> (cout, N).

    h: (cin, Bb*T), time flattened on lanes.  Tap m multiplies h shifted right
    in time by s = (k-1-m)*dilation; the (t % T >= s) mask zeroes both the roll
    wrap-around and any cross-batch-element bleed on the flattened lane axis.
    """
    use_mxu = min(cin, cout) >= _MXU_MIN_CH
    b_col = slab_ref[b_row:b_row + cout, 0:1]                     # (cout, 1)
    y = jnp.broadcast_to(b_col, (cout, N))
    for m in range(k):
        s = (k - 1 - m) * dilation
        if s >= T:        # this tap only ever sees left padding -> contributes 0
            continue
        if s == 0:
            xs = h
        else:
            xs = jnp.where(tidx >= s, pltpu.roll(h, shift=s, axis=1), 0.0)
        r0 = w_row + m * tap_stride
        w_m = slab_ref[r0:r0 + cout, 0:cin]                       # (cout, cin)
        if use_mxu:
            # TODO(synk): for production channel counts cast w_m/xs to bf16 here
            # (keep f32 accumulation) for 2x MXU throughput on v5e/v6e/v7x.
            y = y + jnp.dot(w_m, xs, preferred_element_type=jnp.float32)
        else:
            # Tiny channels: unrolled VPU broadcast-FMA outer product; MXU idle.
            for ci in range(cin):
                y = y + w_m[:, ci:ci + 1] * xs[ci:ci + 1, :]
    return y


def _make_tcn_kernel(level_cfgs, *, k, T, N):
    """level_cfgs: static tuple of dicts with channels, dilation, slab offsets."""

    def kernel(x_ref, slab_ref, out_ref):
        # Time index (within each batch element) of every flattened lane column.
        tidx = jax.lax.broadcasted_iota(jnp.int32, (1, N), 1) % T
        h = x_ref[...]                                            # (C0, N) f32
        for cfg in level_cfgs:
            cin, cout, d = cfg["cin"], cfg["cout"], cfg["dilation"]
            ts = cfg["tap_stride"]
            # conv1 -> chomp -> relu -> dropout (eval-mode identity)
            a = _conv_taps(slab_ref, h, tidx, cin=cin, cout=cout, k=k, dilation=d,
                           w_row=cfg["w1"], b_row=cfg["b1"], tap_stride=ts,
                           N=N, T=T)
            a = jnp.maximum(a, 0.0)
            # conv2 -> chomp -> relu -> dropout (eval-mode identity)
            a = _conv_taps(slab_ref, a, tidx, cin=cout, cout=cout, k=k, dilation=d,
                           w_row=cfg["w2"], b_row=cfg["b2"], tap_stride=ts,
                           N=N, T=T)
            a = jnp.maximum(a, 0.0)
            # residual branch: 1x1 conv downsample iff cin != cout
            if cfg["has_down"]:
                res = _conv_taps(slab_ref, h, tidx, cin=cin, cout=cout, k=1,
                                 dilation=1, w_row=cfg["wd"], b_row=cfg["bd"],
                                 tap_stride=ts, N=N, T=T)
            else:
                res = h
            h = jnp.maximum(a + res, 0.0)                        # final block ReLU
        out_ref[...] = h

    return kernel


# ---------------------------------------------------------------------------
# Host wrapper
# ---------------------------------------------------------------------------
def _choose_batch_tile(B, T, c_max):
    """Pick the batch tile from a VMEM budget.

    Lane-axis blocks are kept multiples of 128 columns (lane-dense stores, legal
    BlockSpec blocking for any grid size, native-width rolls).  No forced >=2
    grid steps: that is pure per-step overhead on single-TensorCore v5e/v6e.
    """
    bstep = 128 // math.gcd(T, 128)            # batch elems per 128 lane columns
    b_eff = _rup(B, bstep)
    per_b = 8 * c_max * T * 4                  # rough live activation bytes/elem
    budget = 8 * 2 ** 20                       # comfortably inside all-gen VMEM
    nb = max(bstep, (max(1, budget // per_b) // bstep) * bstep)
    bb = min(b_eff, nb)
    grid = pl.cdiv(b_eff, bb)
    return bb, grid


def tcn_forward(x_ncw, slab, level_cfgs, *, num_inputs, num_channels, kernel_size):
    """x_ncw: (B, C_in, T) float32 (PyTorch NCW).  Returns (B, C_out, T)."""
    B, C0, T = x_ncw.shape
    assert C0 == num_inputs
    c_last = num_channels[-1]
    c_max = max([num_inputs] + list(num_channels))

    Bb, grid = _choose_batch_tile(B, T, c_max)
    Bpad = Bb * grid
    N = Bb * T                                  # lane columns per grid step

    # (B, C, T) -> (C, Bpad*T): channels on sublanes, batch*time on lanes.
    x_cbt = jnp.transpose(x_ncw, (1, 0, 2))
    if Bpad != B:
        x_cbt = jnp.pad(x_cbt, ((0, 0), (0, Bpad - B), (0, 0)))
    x_flat = x_cbt.reshape(C0, Bpad * T)

    kernel = _make_tcn_kernel(level_cfgs, k=kernel_size, T=T, N=N)

    # Advisory cost estimate so XLA schedules the call sensibly.
    flops = 0
    cin = num_inputs
    for cout in num_channels:
        flops += 2 * Bpad * T * kernel_size * (cin * cout + cout * cout)
        if cin != cout:
            flops += 2 * Bpad * T * cin * cout
        cin = cout
    bytes_accessed = 4 * (x_flat.size + Bpad * T * c_last + int(slab.size))
    cost = pl.CostEstimate(flops=flops, transcendentals=0,
                           bytes_accessed=bytes_accessed)

    # Explicit VMEM budget: double-buffered in/out tiles + slab + live activations.
    est = 4 * (2 * (C0 + c_last) * N + int(slab.size) + 10 * c_max * N)
    vmem_limit = int(min(64 * 2 ** 20, max(32 * 2 ** 20, 2 * est)))

    out_flat = pl.pallas_call(
        kernel,
        out_shape=jax.ShapeDtypeStruct((c_last, Bpad * T), jnp.float32),
        grid_spec=pltpu.PrefetchScalarGridSpec(
            num_scalar_prefetch=0,
            grid=(grid,),
            in_specs=[
                pl.BlockSpec((C0, N), lambda b: (0, b)),
                pl.BlockSpec(slab.shape, lambda b: (0, 0)),   # grid-invariant weights
            ],
            out_specs=pl.BlockSpec((c_last, N), lambda b: (0, b)),
        ),
        compiler_params=pltpu.CompilerParams(
            dimension_semantics=("parallel",),
            vmem_limit_bytes=vmem_limit),
        cost_estimate=cost,
    )(x_flat, slab)

    out = out_flat.reshape(c_last, Bpad, T)[:, :B, :]
    return jnp.transpose(out, (1, 0, 2))        # back to PyTorch (B, C, T)


# ---------------------------------------------------------------------------
# Parameters: PyTorch-layout weights + packed kernel slab
# ---------------------------------------------------------------------------
def _weight_norm(v, g):
    # torch.nn.utils.weight_norm(dim=0): w = g * v / ||v||, norm over dims (1, 2).
    norm = jnp.sqrt(jnp.sum(v * v, axis=(1, 2), keepdims=True))
    return v * (g[:, None, None] / norm)


def init_params(key, *, num_inputs, num_channels, kernel_size):
    """Deterministic synthetic weights in PyTorch layout (weight_norm folded)."""
    torch_p = []
    cin = num_inputs
    level_keys = jax.random.split(key, len(num_channels))
    for i, cout in enumerate(num_channels):
        ks = jax.random.split(level_keys[i], 8)

        def conv_w(kv, kg, ci):
            v = 0.01 * jax.random.normal(kv, (cout, ci, kernel_size), jnp.float32)
            g = jax.random.uniform(kg, (cout,), jnp.float32, 0.5, 1.5)
            return _weight_norm(v, g)

        w1 = conv_w(ks[0], ks[1], cin)
        b1 = jax.random.uniform(ks[2], (cout,), jnp.float32,
                                -1.0 / np.sqrt(cin * kernel_size),
                                1.0 / np.sqrt(cin * kernel_size))
        w2 = conv_w(ks[3], ks[4], cout)
        b2 = jax.random.uniform(ks[5], (cout,), jnp.float32,
                                -1.0 / np.sqrt(cout * kernel_size),
                                1.0 / np.sqrt(cout * kernel_size))
        lvl = dict(w1=w1, b1=b1, w2=w2, b2=b2)
        if cin != cout:                                    # 1x1 downsample conv
            wd = 0.01 * jax.random.normal(ks[6], (cout, cin, 1), jnp.float32)
            bd = jax.random.uniform(ks[7], (cout,), jnp.float32,
                                    -1.0 / np.sqrt(cin), 1.0 / np.sqrt(cin))
            lvl["wd"], lvl["bd"] = wd, bd
        torch_p.append(lvl)
        cin = cout
    return torch_p


def pack_slab(torch_p, *, num_inputs, num_channels, kernel_size):
    """Pack every level's weights + biases into ONE sublane-aligned f32 slab."""
    c_max = max([num_inputs] + list(num_channels))
    pieces, cfgs = [], []
    off = 0

    def add_piece(arr2d):
        nonlocal off
        rows = _rup(arr2d.shape[0])
        blk = np.zeros((rows, c_max), np.float32)
        blk[:arr2d.shape[0], :arr2d.shape[1]] = arr2d
        pieces.append(blk)
        start = off
        off += rows
        return start

    cin = num_inputs
    for i, cout in enumerate(num_channels):
        lvl = torch_p[i]
        cfg = dict(cin=cin, cout=cout, dilation=2 ** i, has_down=(cin != cout),
                   tap_stride=_rup(cout))
        w1 = np.asarray(lvl["w1"])                         # (cout, cin, k)
        w2 = np.asarray(lvl["w2"])
        cfg["w1"] = add_piece(w1[:, :, 0])
        for m in range(1, kernel_size):
            add_piece(w1[:, :, m])
        cfg["b1"] = add_piece(np.asarray(lvl["b1"])[:, None])
        cfg["w2"] = add_piece(w2[:, :, 0])
        for m in range(1, kernel_size):
            add_piece(w2[:, :, m])
        cfg["b2"] = add_piece(np.asarray(lvl["b2"])[:, None])
        if cin != cout:
            cfg["wd"] = add_piece(np.asarray(lvl["wd"])[:, :, 0])
            cfg["bd"] = add_piece(np.asarray(lvl["bd"])[:, None])
        cfgs.append(cfg)
        cin = cout
    slab = jnp.asarray(np.concatenate(pieces, axis=0))
    return slab, tuple(cfgs)


# ---------------------------------------------------------------------------
# Pure-JAX reference (mirror of the PyTorch eval-mode forward)
# ---------------------------------------------------------------------------
def reference_forward(x_ncw, torch_p, *, num_inputs, num_channels, kernel_size):
    h = x_ncw
    cin = num_inputs
    for i, cout in enumerate(num_channels):
        d = 2 ** i
        p = (kernel_size - 1) * d
        lvl = torch_p[i]

        def conv(inp, w, b):
            # Conv1d(padding=p, dilation=d) then Chomp1d(p) == left-pad-only conv.
            y = jax.lax.conv_general_dilated(
                inp, w, window_strides=(1,), padding=[(p, 0)], rhs_dilation=(d,),
                dimension_numbers=("NCH", "OIH", "NCH"))
            return y + b[None, :, None]

        a = jnp.maximum(conv(h, lvl["w1"], lvl["b1"]), 0.0)
        a = jnp.maximum(conv(a, lvl["w2"], lvl["b2"]), 0.0)
        if cin != cout:
            res = (jnp.einsum("oc,bct->bot", lvl["wd"][:, :, 0], h)
                   + lvl["bd"][None, :, None])
        else:
            res = h
        h = jnp.maximum(a + res, 0.0)
        cin = cout
    return h


if __name__ == "__main__":
    # TemporalConvNet(num_inputs=4, num_channels=[8, 8], kernel_size=2, dropout=0.2)
    # in eval mode on x of shape (batch=2, channels=4, time=16).
    B, C, T = 2, 4, 16
    num_channels = (8, 8)
    kernel_size = 2

    key = jax.random.PRNGKey(0)
    kx, kp = jax.random.split(key)
    x = jax.random.normal(kx, (B, C, T), jnp.float32)       # PyTorch NCW layout

    torch_p = init_params(kp, num_inputs=C, num_channels=num_channels,
                          kernel_size=kernel_size)
    slab, level_cfgs = pack_slab(torch_p, num_inputs=C,
                                 num_channels=num_channels,
                                 kernel_size=kernel_size)

    out = tcn_forward(x, slab, level_cfgs, num_inputs=C,
                      num_channels=num_channels, kernel_size=kernel_size)
    out = jax.block_until_ready(out)

    ref = reference_forward(x, torch_p, num_inputs=C, num_channels=num_channels,
                            kernel_size=kernel_size)
    np.testing.assert_allclose(np.asarray(out), np.asarray(ref),
                               rtol=1e-4, atol=1e-5)
    print("KERNEL_OK")
</pallas_src>

<mosaic_0001>
module attributes {stable_mosaic.version = 11 : i64} {
  func.func @kernel(%arg0: i32, %arg1: memref<4x128xf32, #tpu.memory_space<vmem>>, %arg2: memref<112x8xf32, #tpu.memory_space<vmem>>, %arg3: memref<8x128xf32, #tpu.memory_space<vmem>>) attributes {dimension_semantics = [#tpu.dimension_semantics<parallel>], iteration_bounds = array<i64: 1>, scalar_prefetch = 0 : i64, scratch_operands = 0 : i64, tpu.core_type = #tpu.core_type<tc>, window_params = [{transform_indices = @transform_0, window_bounds = array<i64: 4, 128>}, {pipeline_mode = #tpu.pipeline_mode<synchronous>, transform_indices = @transform_1, window_bounds = array<i64: 112, 8>}, {transform_indices = @transform_2, window_bounds = array<i64: 8, 128>}]} {
    %0 = tpu.iota {dimensions = array<i32: 1>} : vector<1x128xi32>
    %c16_i32 = arith.constant 16 : i32
    %c0_i32 = arith.constant 0 : i32
    %1 = arith.cmpi eq, %c16_i32, %c0_i32 : i32
    %c1_i32 = arith.constant 1 : i32
    %2 = arith.select %1, %c1_i32, %c16_i32 : i32
    %3 = vector.broadcast %2 : i32 to vector<1x128xi32>
    %4 = arith.remsi %0, %3 : vector<1x128xi32>
    %c0_i32_0 = arith.constant 0 : i32
    %5 = vector.broadcast %c0_i32_0 : i32 to vector<1x128xi32>
    %6 = arith.cmpi ne, %4, %5 : vector<1x128xi32>
    %c0_i32_1 = arith.constant 0 : i32
    %7 = vector.broadcast %c0_i32_1 : i32 to vector<1x128xi32>
    %8 = arith.cmpi slt, %4, %7 : vector<1x128xi32>
    %c0_i32_2 = arith.constant 0 : i32
    %9 = arith.cmpi slt, %2, %c0_i32_2 : i32
    %10 = vector.broadcast %9 : i1 to vector<1x128xi1>
    %11 = vector.broadcast %10 : vector<1x128xi1> to vector<1x128xi1>
    %12 = arith.xori %8, %11 : vector<1x128xi1>
    %13 = arith.andi %12, %6 : vector<1x128xi1>
    %14 = vector.broadcast %2 : i32 to vector<1x128xi32>
    %15 = arith.addi %4, %14 : vector<1x128xi32>
    %16 = arith.select %13, %15, %4 : vector<1x128xi1>, vector<1x128xi32>
    %c0 = arith.constant 0 : index
    %c0_3 = arith.constant 0 : index
    %17 = vector.load %arg1[%c0, %c0_3] : memref<4x128xf32, #tpu.memory_space<vmem>>, vector<4x128xf32>
    %c16 = arith.constant 16 : index
    %c0_4 = arith.constant 0 : index
    %18 = vector.load %arg2[%c16, %c0_4] : memref<112x8xf32, #tpu.memory_space<vmem>>, vector<8x1xf32>
    %19 = vector.shape_cast %18 : vector<8x1xf32> to vector<8x1xf32>
    %20 = vector.broadcast %19 : vector<8x1xf32> to vector<8x128xf32>
    %c1_i32_5 = arith.constant 1 : i32
    %21 = vector.broadcast %c1_i32_5 : i32 to vector<1x128xi32>
    %22 = arith.cmpi sge, %16, %21 : vector<1x128xi32>
    %c1_i32_6 = arith.constant 1 : i32
    %23 = tpu.dynamic_rotate %17 by %c1_i32_6 dim 1 : vector<4x128xf32>, i32 -> vector<4x128xf32>
    %cst = arith.constant 0.000000e+00 : f32
    %24 = vector.shape_cast %22 : vector<1x128xi1> to vector<1x128xi1>
    %25 = vector.broadcast %24 : vector<1x128xi1> to vector<4x128xi1>
    %26 = vector.broadcast %cst : f32 to vector<4x128xf32>
    %27 = arith.select %25, %23, %26 : vector<4x128xi1>, vector<4x128xf32>
    %c0_7 = arith.constant 0 : index
    %c0_8 = arith.constant 0 : index
    %28 = vector.load %arg2[%c0_7, %c0_8] : memref<112x8xf32, #tpu.memory_space<vmem>>, vector<8x4xf32>
    %29 = vector.extract_strided_slice %28 {offsets = [0, 0], sizes = [8, 1], strides = [1, 1]} : vector<8x4xf32> to vector<8x1xf32>
    %30 = vector.extract_strided_slice %27 {offsets = [0, 0], sizes = [1, 128], strides = [1, 1]} : vector<4x128xf32> to vector<1x128xf32>
    %31 = vector.broadcast %29 : vector<8x1xf32> to vector<8x128xf32>
    %32 = vector.broadcast %30 : vector<1x128xf32> to vector<8x128xf32>
    %33 = arith.mulf %31, %32 : vector<8x128xf32>
    %34 = arith.addf %20, %33 : vector<8x128xf32>
    %35 = vector.extract_strided_slice %28 {offsets = [0, 1], sizes = [8, 1], strides = [1, 1]} : vector<8x4xf32> to vector<8x1xf32>
    %36 = vector.extract_strided_slice %27 {offsets = [1, 0], sizes = [1, 128], strides = [1, 1]} : vector<4x128xf32> to vector<1x128xf32>
    %37 = vector.broadcast %35 : vector<8x1xf32> to vector<8x128xf32>
    %38 = vector.broadcast %36 : vector<1x128xf32> to vector<8x128xf32>
    %39 = arith.mulf %37, %38 : vector<8x128xf32>
    %40 = arith.addf %34, %39 : vector<8x128xf32>
    %41 = vector.extract_strided_slice %28 {offsets = [0, 2], sizes = [8, 1], strides = [1, 1]} : vector<8x4xf32> to vector<8x1xf32>
    %42 = vector.extract_strided_slice %27 {offsets = [2, 0], sizes = [1, 128], strides = [1, 1]} : vector<4x128xf32> to vector<1x128xf32>
    %43 = vector.broadcast %41 : vector<8x1xf32> to vector<8x128xf32>
    %44 = vector.broadcast %42 : vector<1x128xf32> to vector<8x128xf32>
    %45 = arith.mulf %43, %44 : vector<8x128xf32>
    %46 = arith.addf %40, %45 : vector<8x128xf32>
    %47 = vector.extract_strided_slice %28 {offsets = [0, 3], sizes = [8, 1], strides = [1, 1]} : vector<8x4xf32> to vector<8x1xf32>
    %48 = vector.extract_strided_slice %27 {offsets = [3, 0], sizes = [1, 128], strides = [1, 1]} : vector<4x128xf32> to vector<1x128xf32>
    %49 = vector.broadcast %47 : vector<8x1xf32> to vector<8x128xf32>
    %50 = vector.broadcast %48 : vector<1x128xf32> to vector<8x128xf32>
    %51 = arith.mulf %49, %50 : vector<8x128xf32>
    %52 = arith.addf %46, %51 : vector<8x128xf32>
    %c8 = arith.constant 8 : index
    %c0_9 = arith.constant 0 : index
    %53 = vector.load %arg2[%c8, %c0_9] : memref<112x8xf32, #tpu.memory_space<vmem>>, vector<8x4xf32>
    %54 = vector.extract_strided_slice %53 {offsets = [0, 0], sizes = [8, 1], strides = [1, 1]} : vector<8x4xf32> to vector<8x1xf32>
    %55 = vector.extract_strided_slice %17 {offsets = [0, 0], sizes = [1, 128], strides = [1, 1]} : vector<4x128xf32> to vector<1x128xf32>
    %56 = vector.broadcast %54 : vector<8x1xf32> to vector<8x128xf32>
    %57 = vector.broadcast %55 : vector<1x128xf32> to vector<8x128xf32>
    %58 = arith.mulf %56, %57 : vector<8x128xf32>
    %59 = arith.addf %52, %58 : vector<8x128xf32>
    %60 = vector.extract_strided_slice %53 {offsets = [0, 1], sizes = [8, 1], strides = [1, 1]} : vector<8x4xf32> to vector<8x1xf32>
    %61 = vector.extract_strided_slice %17 {offsets = [1, 0], sizes = [1, 128], strides = [1, 1]} : vector<4x128xf32> to vector<1x128xf32>
    %62 = vector.broadcast %60 : vector<8x1xf32> to vector<8x128xf32>
    %63 = vector.broadcast %61 : vector<1x128xf32> to vector<8x128xf32>
    %64 = arith.mulf %62, %63 : vector<8x128xf32>
    %65 = arith.addf %59, %64 : vector<8x128xf32>
    %66 = vector.extract_strided_slice %53 {offsets = [0, 2], sizes = [8, 1], strides = [1, 1]} : vector<8x4xf32> to vector<8x1xf32>
    %67 = vector.extract_strided_slice %17 {offsets = [2, 0], sizes = [1, 128], strides = [1, 1]} : vector<4x128xf32> to vector<1x128xf32>
    %68 = vector.broadcast %66 : vector<8x1xf32> to vector<8x128xf32>
    %69 = vector.broadcast %67 : vector<1x128xf32> to vector<8x128xf32>
    %70 = arith.mulf %68, %69 : vector<8x128xf32>
    %71 = arith.addf %65, %70 : vector<8x128xf32>
    %72 = vector.extract_strided_slice %53 {offsets = [0, 3], sizes = [8, 1], strides = [1, 1]} : vector<8x4xf32> to vector<8x1xf32>
    %73 = vector.extract_strided_slice %17 {offsets = [3, 0], sizes = [1, 128], strides = [1, 1]} : vector<4x128xf32> to vector<1x128xf32>
    %74 = vector.broadcast %72 : vector<8x1xf32> to vector<8x128xf32>
    %75 = vector.broadcast %73 : vector<1x128xf32> to vector<8x128xf32>
    %76 = arith.mulf %74, %75 : vector<8x128xf32>
    %77 = arith.addf %71, %76 : vector<8x128xf32>
    %cst_10 = arith.constant 0.000000e+00 : f32
    %78 = vector.broadcast %cst_10 : f32 to vector<8x128xf32>
    %79 = arith.maximumf %77, %78 : vector<8x128xf32>
    %c40 = arith.constant 40 : index
    %c0_11 = arith.constant 0 : index
    %80 = vector.load %arg2[%c40, %c0_11] : memref<112x8xf32, #tpu.memory_space<vmem>>, vector<8x1xf32>
    %81 = vector.shape_cast %80 : vector<8x1xf32> to vector<8x1xf32>
    %82 = vector.broadcast %81 : vector<8x1xf32> to vector<8x128xf32>
    %c1_i32_12 = arith.constant 1 : i32
    %83 = vector.broadcast %c1_i32_12 : i32 to vector<1x128xi32>
    %84 = arith.cmpi sge, %16, %83 : vector<1x128xi32>
    %c1_i32_13 = arith.constant 1 : i32
    %85 = tpu.dynamic_rotate %79 by %c1_i32_13 dim 1 : vector<8x128xf32>, i32 -> vector<8x128xf32>
    %cst_14 = arith.constant 0.000000e+00 : f32
    %86 = vector.shape_cast %84 : vector<1x128xi1> to vector<1x128xi1>
    %87 = vector.broadcast %86 : vector<1x128xi1> to vector<8x128xi1>
    %88 = vector.broadcast %cst_14 : f32 to vector<8x128xf32>
    %89 = arith.select %87, %85, %88 : vector<8x128xi1>, vector<8x128xf32>
    %c24 = arith.constant 24 : index
    %c0_15 = arith.constant 0 : index
    %90 = vector.load %arg2[%c24, %c0_15] : memref<112x8xf32, #tpu.memory_space<vmem>>, vector<8x8xf32>
    %91 = vector.extract_strided_slice %90 {offsets = [0, 0], sizes = [8, 1], strides = [1, 1]} : vector<8x8xf32> to vector<8x1xf32>
    %92 = vector.extract_strided_slice %89 {offsets = [0, 0], sizes = [1, 128], strides = [1, 1]} : vector<8x128xf32> to vector<1x128xf32>
    %93 = vector.broadcast %91 : vector<8x1xf32> to vector<8x128xf32>
    %94 = vector.broadcast %92 : vector<1x128xf32> to vector<8x128xf32>
    %95 = arith.mulf %93, %94 : vector<8x128xf32>
    %96 = arith.addf %82, %95 : vector<8x128xf32>
    %97 = vector.extract_strided_slice %90 {offsets = [0, 1], sizes = [8, 1], strides = [1, 1]} : vector<8x8xf32> to vector<8x1xf32>
    %98 = vector.extract_strided_slice %89 {offsets = [1, 0], sizes = [1, 128], strides = [1, 1]} : vector<8x128xf32> to vector<1x128xf32>
    %99 = vector.broadcast %97 : vector<8x1xf32> to vector<8x128xf32>
    %100 = vector.broadcast %98 : vector<1x128xf32> to vector<8x128xf32>
    %101 = arith.mulf %99, %100 : vector<8x128xf32>
    %102 = arith.addf %96, %101 : vector<8x128xf32>
    %103 = vector.extract_strided_slice %90 {offsets = [0, 2], sizes = [8, 1], strides = [1, 1]} : vector<8x8xf32> to vector<8x1xf32>
    %104 = vector.extract_strided_slice %89 {offsets = [2, 0], sizes = [1, 128], strides = [1, 1]} : vector<8x128xf32> to vector<1x128xf32>
    %105 = vector.broadcast %103 : vector<8x1xf32> to vector<8x128xf32>
    %106 = vector.broadcast %104 : vector<1x128xf32> to vector<8x128xf32>
    %107 = arith.mulf %105, %106 : vector<8x128xf32>
    %108 = arith.addf %102, %107 : vector<8x128xf32>
    %109 = vector.extract_strided_slice %90 {offsets = [0, 3], sizes = [8, 1], strides = [1, 1]} : vector<8x8xf32> to vector<8x1xf32>
    %110 = vector.extract_strided_slice %89 {offsets = [3, 0], sizes = [1, 128], strides = [1, 1]} : vector<8x128xf32> to vector<1x128xf32>
    %111 = vector.broadcast %109 : vector<8x1xf32> to vector<8x128xf32>
    %112 = vector.broadcast %110 : vector<1x128xf32> to vector<8x128xf32>
    %113 = arith.mulf %111, %112 : vector<8x128xf32>
    %114 = arith.addf %108, %113 : vector<8x128xf32>
    %115 = vector.extract_strided_slice %90 {offsets = [0, 4], sizes = [8, 1], strides = [1, 1]} : vector<8x8xf32> to vector<8x1xf32>
    %116 = vector.extract_strided_slice %89 {offsets = [4, 0], sizes = [1, 128], strides = [1, 1]} : vector<8x128xf32> to vector<1x128xf32>
    %117 = vector.broadcast %115 : vector<8x1xf32> to vector<8x128xf32>
    %118 = vector.broadcast %116 : vector<1x128xf32> to vector<8x128xf32>
    %119 = arith.mulf %117, %118 : vector<8x128xf32>
    %120 = arith.addf %114, %119 : vector<8x128xf32>
    %121 = vector.extract_strided_slice %90 {offsets = [0, 5], sizes = [8, 1], strides = [1, 1]} : vector<8x8xf32> to vector<8x1xf32>
    %122 = vector.extract_strided_slice %89 {offsets = [5, 0], sizes = [1, 128], strides = [1, 1]} : vector<8x128xf32> to vector<1x128xf32>
    %123 = vector.broadcast %121 : vector<8x1xf32> to vector<8x128xf32>
    %124 = vector.broadcast %122 : vector<1x128xf32> to vector<8x128xf32>
    %125 = arith.mulf %123, %124 : vector<8x128xf32>
    %126 = arith.addf %120, %125 : vector<8x128xf32>
    %127 = vector.extract_strided_slice %90 {offsets = [0, 6], sizes = [8, 1], strides = [1, 1]} : vector<8x8xf32> to vector<8x1xf32>
    %128 = vector.extract_strided_slice %89 {offsets = [6, 0], sizes = [1, 128], strides = [1, 1]} : vector<8x128xf32> to vector<1x128xf32>
    %129 = vector.broadcast %127 : vector<8x1xf32> to vector<8x128xf32>
    %130 = vector.broadcast %128 : vector<1x128xf32> to vector<8x128xf32>
    %131 = arith.mulf %129, %130 : vector<8x128xf32>
    %132 = arith.addf %126, %131 : vector<8x128xf32>
    %133 = vector.extract_strided_slice %90 {offsets = [0, 7], sizes = [8, 1], strides = [1, 1]} : vector<8x8xf32> to vector<8x1xf32>
    %134 = vector.extract_strided_slice %89 {offsets = [7, 0], sizes = [1, 128], strides = [1, 1]} : vector<8x128xf32> to vector<1x128xf32>
    %135 = vector.broadcast %133 : vector<8x1xf32> to vector<8x128xf32>
    %136 = vector.broadcast %134 : vector<1x128xf32> to vector<8x128xf32>
    %137 = arith.mulf %135, %136 : vector<8x128xf32>
    %138 = arith.addf %132, %137 : vector<8x128xf32>
    %c32 = arith.constant 32 : index
    %c0_16 = arith.constant 0 : index
    %139 = vector.load %arg2[%c32, %c0_16] : memref<112x8xf32, #tpu.memory_space<vmem>>, vector<8x8xf32>
    %140 = vector.extract_strided_slice %139 {offsets = [0, 0], sizes = [8, 1], strides = [1, 1]} : vector<8x8xf32> to vector<8x1xf32>
    %141 = vector.extract_strided_slice %79 {offsets = [0, 0], sizes = [1, 128], strides = [1, 1]} : vector<8x128xf32> to vector<1x128xf32>
    %142 = vector.broadcast %140 : vector<8x1xf32> to vector<8x128xf32>
    %143 = vector.broadcast %141 : vector<1x128xf32> to vector<8x128xf32>
    %144 = arith.mulf %142, %143 : vector<8x128xf32>
    %145 = arith.addf %138, %144 : vector<8x128xf32>
    %146 = vector.extract_strided_slice %139 {offsets = [0, 1], sizes = [8, 1], strides = [1, 1]} : vector<8x8xf32> to vector<8x1xf32>
    %147 = vector.extract_strided_slice %79 {offsets = [1, 0], sizes = [1, 128], strides = [1, 1]} : vector<8x128xf32> to vector<1x128xf32>
    %148 = vector.broadcast %146 : vector<8x1xf32> to vector<8x128xf32>
    %149 = vector.broadcast %147 : vector<1x128xf32> to vector<8x128xf32>
    %150 = arith.mulf %148, %149 : vector<8x128xf32>
    %151 = arith.addf %145, %150 : vector<8x128xf32>
    %152 = vector.extract_strided_slice %139 {offsets = [0, 2], sizes = [8, 1], strides = [1, 1]} : vector<8x8xf32> to vector<8x1xf32>
    %153 = vector.extract_strided_slice %79 {offsets = [2, 0], sizes = [1, 128], strides = [1, 1]} : vector<8x128xf32> to vector<1x128xf32>
    %154 = vector.broadcast %152 : vector<8x1xf32> to vector<8x128xf32>
    %155 = vector.broadcast %153 : vector<1x128xf32> to vector<8x128xf32>
    %156 = arith.mulf %154, %155 : vector<8x128xf32>
    %157 = arith.addf %151, %156 : vector<8x128xf32>
    %158 = vector.extract_strided_slice %139 {offsets = [0, 3], sizes = [8, 1], strides = [1, 1]} : vector<8x8xf32> to vector<8x1xf32>
    %159 = vector.extract_strided_slice %79 {offsets = [3, 0], sizes = [1, 128], strides = [1, 1]} : vector<8x128xf32> to vector<1x128xf32>
    %160 = vector.broadcast %158 : vector<8x1xf32> to vector<8x128xf32>
    %161 = vector.broadcast %159 : vector<1x128xf32> to vector<8x128xf32>
    %162 = arith.mulf %160, %161 : vector<8x128xf32>
    %163 = arith.addf %157, %162 : vector<8x128xf32>
    %164 = vector.extract_strided_slice %139 {offsets = [0, 4], sizes = [8, 1], strides = [1, 1]} : vector<8x8xf32> to vector<8x1xf32>
    %165 = vector.extract_strided_slice %79 {offsets = [4, 0], sizes = [1, 128], strides = [1, 1]} : vector<8x128xf32> to vector<1x128xf32>
    %166 = vector.broadcast %164 : vector<8x1xf32> to vector<8x128xf32>
    %167 = vector.broadcast %165 : vector<1x128xf32> to vector<8x128xf32>
    %168 = arith.mulf %166, %167 : vector<8x128xf32>
    %169 = arith.addf %163, %168 : vector<8x128xf32>
    %170 = vector.extract_strided_slice %139 {offsets = [0, 5], sizes = [8, 1], strides = [1, 1]} : vector<8x8xf32> to vector<8x1xf32>
    %171 = vector.extract_strided_slice %79 {offsets = [5, 0], sizes = [1, 128], strides = [1, 1]} : vector<8x128xf32> to vector<1x128xf32>
    %172 = vector.broadcast %170 : vector<8x1xf32> to vector<8x128xf32>
    %173 = vector.broadcast %171 : vector<1x128xf32> to vector<8x128xf32>
    %174 = arith.mulf %172, %173 : vector<8x128xf32>
    %175 = arith.addf %169, %174 : vector<8x128xf32>
    %176 = vector.extract_strided_slice %139 {offsets = [0, 6], sizes = [8, 1], strides = [1, 1]} : vector<8x8xf32> to vector<8x1xf32>
    %177 = vector.extract_strided_slice %79 {offsets = [6, 0], sizes = [1, 128], strides = [1, 1]} : vector<8x128xf32> to vector<1x128xf32>
    %178 = vector.broadcast %176 : vector<8x1xf32> to vector<8x128xf32>
    %179 = vector.broadcast %177 : vector<1x128xf32> to vector<8x128xf32>
    %180 = arith.mulf %178, %179 : vector<8x128xf32>
    %181 = arith.addf %175, %180 : vector<8x128xf32>
    %182 = vector.extract_strided_slice %139 {offsets = [0, 7], sizes = [8, 1], strides = [1, 1]} : vector<8x8xf32> to vector<8x1xf32>
    %183 = vector.extract_strided_slice %79 {offsets = [7, 0], sizes = [1, 128], strides = [1, 1]} : vector<8x128xf32> to vector<1x128xf32>
    %184 = vector.broadcast %182 : vector<8x1xf32> to vector<8x128xf32>
    %185 = vector.broadcast %183 : vector<1x128xf32> to vector<8x128xf32>
    %186 = arith.mulf %184, %185 : vector<8x128xf32>
    %187 = arith.addf %181, %186 : vector<8x128xf32>
    %cst_17 = arith.constant 0.000000e+00 : f32
    %188 = vector.broadcast %cst_17 : f32 to vector<8x128xf32>
    %189 = arith.maximumf %187, %188 : vector<8x128xf32>
    %c56 = arith.constant 56 : index
    %c0_18 = arith.constant 0 : index
    %190 = vector.load %arg2[%c56, %c0_18] : memref<112x8xf32, #tpu.memory_space<vmem>>, vector<8x1xf32>
    %191 = vector.shape_cast %190 : vector<8x1xf32> to vector<8x1xf32>
    %192 = vector.broadcast %191 : vector<8x1xf32> to vector<8x128xf32>
    %c48 = arith.constant 48 : index
    %c0_19 = arith.constant 0 : index
    %193 = vector.load %arg2[%c48, %c0_19] : memref<112x8xf32, #tpu.memory_space<vmem>>, vector<8x4xf32>
    %194 = vector.extract_strided_slice %193 {offsets = [0, 0], sizes = [8, 1], strides = [1, 1]} : vector<8x4xf32> to vector<8x1xf32>
    %195 = vector.extract_strided_slice %17 {offsets = [0, 0], sizes = [1, 128], strides = [1, 1]} : vector<4x128xf32> to vector<1x128xf32>
    %196 = vector.broadcast %194 : vector<8x1xf32> to vector<8x128xf32>
    %197 = vector.broadcast %195 : vector<1x128xf32> to vector<8x128xf32>
    %198 = arith.mulf %196, %197 : vector<8x128xf32>
    %199 = arith.addf %192, %198 : vector<8x128xf32>
    %200 = vector.extract_strided_slice %193 {offsets = [0, 1], sizes = [8, 1], strides = [1, 1]} : vector<8x4xf32> to vector<8x1xf32>
    %201 = vector.extract_strided_slice %17 {offsets = [1, 0], sizes = [1, 128], strides = [1, 1]} : vector<4x128xf32> to vector<1x128xf32>
    %202 = vector.broadcast %200 : vector<8x1xf32> to vector<8x128xf32>
    %203 = vector.broadcast %201 : vector<1x128xf32> to vector<8x128xf32>
    %204 = arith.mulf %202, %203 : vector<8x128xf32>
    %205 = arith.addf %199, %204 : vector<8x128xf32>
    %206 = vector.extract_strided_slice %193 {offsets = [0, 2], sizes = [8, 1], strides = [1, 1]} : vector<8x4xf32> to vector<8x1xf32>
    %207 = vector.extract_strided_slice %17 {offsets = [2, 0], sizes = [1, 128], strides = [1, 1]} : vector<4x128xf32> to vector<1x128xf32>
    %208 = vector.broadcast %206 : vector<8x1xf32> to vector<8x128xf32>
    %209 = vector.broadcast %207 : vector<1x128xf32> to vector<8x128xf32>
    %210 = arith.mulf %208, %209 : vector<8x128xf32>
    %211 = arith.addf %205, %210 : vector<8x128xf32>
    %212 = vector.extract_strided_slice %193 {offsets = [0, 3], sizes = [8, 1], strides = [1, 1]} : vector<8x4xf32> to vector<8x1xf32>
    %213 = vector.extract_strided_slice %17 {offsets = [3, 0], sizes = [1, 128], strides = [1, 1]} : vector<4x128xf32> to vector<1x128xf32>
    %214 = vector.broadcast %212 : vector<8x1xf32> to vector<8x128xf32>
    %215 = vector.broadcast %213 : vector<1x128xf32> to vector<8x128xf32>
    %216 = arith.mulf %214, %215 : vector<8x128xf32>
    %217 = arith.addf %211, %216 : vector<8x128xf32>
    %218 = arith.addf %189, %217 : vector<8x128xf32>
    %cst_20 = arith.constant 0.000000e+00 : f32
    %219 = vector.broadcast %cst_20 : f32 to vector<8x128xf32>
    %220 = arith.maximumf %218, %219 : vector<8x128xf32>
    %c80 = arith.constant 80 : index
    %c0_21 = arith.constant 0 : index
    %221 = vector.load %arg2[%c80, %c0_21] : memref<112x8xf32, #tpu.memory_space<vmem>>, vector<8x1xf32>
    %222 = vector.shape_cast %221 : vector<8x1xf32> to vector<8x1xf32>
    %223 = vector.broadcast %222 : vector<8x1xf32> to vector<8x128xf32>
    %c2_i32 = arith.constant 2 : i32
    %224 = vector.broadcast %c2_i32 : i32 to vector<1x128xi32>
    %225 = arith.cmpi sge, %16, %224 : vector<1x128xi32>
    %c2_i32_22 = arith.constant 2 : i32
    %226 = tpu.dynamic_rotate %220 by %c2_i32_22 dim 1 : vector<8x128xf32>, i32 -> vector<8x128xf32>
    %cst_23 = arith.constant 0.000000e+00 : f32
    %227 = vector.shape_cast %225 : vector<1x128xi1> to vector<1x128xi1>
    %228 = vector.broadcast %227 : vector<1x128xi1> to vector<8x128xi1>
    %229 = vector.broadcast %cst_23 : f32 to vector<8x128xf32>
    %230 = arith.select %228, %226, %229 : vector<8x128xi1>, vector<8x128xf32>
    %c64 = arith.constant 64 : index
    %c0_24 = arith.constant 0 : index
    %231 = vector.load %arg2[%c64, %c0_24] : memref<112x8xf32, #tpu.memory_space<vmem>>, vector<8x8xf32>
    %232 = vector.extract_strided_slice %231 {offsets = [0, 0], sizes = [8, 1], strides = [1, 1]} : vector<8x8xf32> to vector<8x1xf32>
    %233 = vector.extract_strided_slice %230 {offsets = [0, 0], sizes = [1, 128], strides = [1, 1]} : vector<8x128xf32> to vector<1x128xf32>
    %234 = vector.broadcast %232 : vector<8x1xf32> to vector<8x128xf32>
    %235 = vector.broadcast %233 : vector<1x128xf32> to vector<8x128xf32>
    %236 = arith.mulf %234, %235 : vector<8x128xf32>
    %237 = arith.addf %223, %236 : vector<8x128xf32>
    %238 = vector.extract_strided_slice %231 {offsets = [0, 1], sizes = [8, 1], strides = [1, 1]} : vector<8x8xf32> to vector<8x1xf32>
    %239 = vector.extract_strided_slice %230 {offsets = [1, 0], sizes = [1, 128], strides = [1, 1]} : vector<8x128xf32> to vector<1x128xf32>
    %240 = vector.broadcast %238 : vector<8x1xf32> to vector<8x128xf32>
    %241 = vector.broadcast %239 : vector<1x128xf32> to vector<8x128xf32>
    %242 = arith.mulf %240, %241 : vector<8x128xf32>
    %243 = arith.addf %237, %242 : vector<8x128xf32>
    %244 = vector.extract_strided_slice %231 {offsets = [0, 2], sizes = [8, 1], strides = [1, 1]} : vector<8x8xf32> to vector<8x1xf32>
    %245 = vector.extract_strided_slice %230 {offsets = [2, 0], sizes = [1, 128], strides = [1, 1]} : vector<8x128xf32> to vector<1x128xf32>
    %246 = vector.broadcast %244 : vector<8x1xf32> to vector<8x128xf32>
    %247 = vector.broadcast %245 : vector<1x128xf32> to vector<8x128xf32>
    %248 = arith.mulf %246, %247 : vector<8x128xf32>
    %249 = arith.addf %243, %248 : vector<8x128xf32>
    %250 = vector.extract_strided_slice %231 {offsets = [0, 3], sizes = [8, 1], strides = [1, 1]} : vector<8x8xf32> to vector<8x1xf32>
    %251 = vector.extract_strided_slice %230 {offsets = [3, 0], sizes = [1, 128], strides = [1, 1]} : vector<8x128xf32> to vector<1x128xf32>
    %252 = vector.broadcast %250 : vector<8x1xf32> to vector<8x128xf32>
    %253 = vector.broadcast %251 : vector<1x128xf32> to vector<8x128xf32>
    %254 = arith.mulf %252, %253 : vector<8x128xf32>
    %255 = arith.addf %249, %254 : vector<8x128xf32>
    %256 = vector.extract_strided_slice %231 {offsets = [0, 4], sizes = [8, 1], strides = [1, 1]} : vector<8x8xf32> to vector<8x1xf32>
    %257 = vector.extract_strided_slice %230 {offsets = [4, 0], sizes = [1, 128], strides = [1, 1]} : vector<8x128xf32> to vector<1x128xf32>
    %258 = vector.broadcast %256 : vector<8x1xf32> to vector<8x128xf32>
    %259 = vector.broadcast %257 : vector<1x128xf32> to vector<8x128xf32>
    %260 = arith.mulf %258, %259 : vector<8x128xf32>
    %261 = arith.addf %255, %260 : vector<8x128xf32>
    %262 = vector.extract_strided_slice %231 {offsets = [0, 5], sizes = [8, 1], strides = [1, 1]} : vector<8x8xf32> to vector<8x1xf32>
    %263 = vector.extract_strided_slice %230 {offsets = [5, 0], sizes = [1, 128], strides = [1, 1]} : vector<8x128xf32> to vector<1x128xf32>
    %264 = vector.broadcast %262 : vector<8x1xf32> to vector<8x128xf32>
    %265 = vector.broadcast %263 : vector<1x128xf32> to vector<8x128xf32>
    %266 = arith.mulf %264, %265 : vector<8x128xf32>
    %267 = arith.addf %261, %266 : vector<8x128xf32>
    %268 = vector.extract_strided_slice %231 {offsets = [0, 6], sizes = [8, 1], strides = [1, 1]} : vector<8x8xf32> to vector<8x1xf32>
    %269 = vector.extract_strided_slice %230 {offsets = [6, 0], sizes = [1, 128], strides = [1, 1]} : vector<8x128xf32> to vector<1x128xf32>
    %270 = vector.broadcast %268 : vector<8x1xf32> to vector<8x128xf32>
    %271 = vector.broadcast %269 : vector<1x128xf32> to vector<8x128xf32>
    %272 = arith.mulf %270, %271 : vector<8x128xf32>
    %273 = arith.addf %267, %272 : vector<8x128xf32>
    %274 = vector.extract_strided_slice %231 {offsets = [0, 7], sizes = [8, 1], strides = [1, 1]} : vector<8x8xf32> to vector<8x1xf32>
    %275 = vector.extract_strided_slice %230 {offsets = [7, 0], sizes = [1, 128], strides = [1, 1]} : vector<8x128xf32> to vector<1x128xf32>
    %276 = vector.broadcast %274 : vector<8x1xf32> to vector<8x128xf32>
    %277 = vector.broadcast %275 : vector<1x128xf32> to vector<8x128xf32>
    %278 = arith.mulf %276, %277 : vector<8x128xf32>
    %279 = arith.addf %273, %278 : vector<8x128xf32>
    %c72 = arith.constant 72 : index
    %c0_25 = arith.constant 0 : index
    %280 = vector.load %arg2[%c72, %c0_25] : memref<112x8xf32, #tpu.memory_space<vmem>>, vector<8x8xf32>
    %281 = vector.extract_strided_slice %280 {offsets = [0, 0], sizes = [8, 1], strides = [1, 1]} : vector<8x8xf32> to vector<8x1xf32>
    %282 = vector.extract_strided_slice %220 {offsets = [0, 0], sizes = [1, 128], strides = [1, 1]} : vector<8x128xf32> to vector<1x128xf32>
    %283 = vector.broadcast %281 : vector<8x1xf32> to vector<8x128xf32>
    %284 = vector.broadcast %282 : vector<1x128xf32> to vector<8x128xf32>
    %285 = arith.mulf %283, %284 : vector<8x128xf32>
    %286 = arith.addf %279, %285 : vector<8x128xf32>
    %287 = vector.extract_strided_slice %280 {offsets = [0, 1], sizes = [8, 1], strides = [1, 1]} : vector<8x8xf32> to vector<8x1xf32>
    %288 = vector.extract_strided_slice %220 {offsets = [1, 0], sizes = [1, 128], strides = [1, 1]} : vector<8x128xf32> to vector<1x128xf32>
    %289 = vector.broadcast %287 : vector<8x1xf32> to vector<8x128xf32>
    %290 = vector.broadcast %288 : vector<1x128xf32> to vector<8x128xf32>
    %291 = arith.mulf %289, %290 : vector<8x128xf32>
    %292 = arith.addf %286, %291 : vector<8x128xf32>
    %293 = vector.extract_strided_slice %280 {offsets = [0, 2], sizes = [8, 1], strides = [1, 1]} : vector<8x8xf32> to vector<8x1xf32>
    %294 = vector.extract_strided_slice %220 {offsets = [2, 0], sizes = [1, 128], strides = [1, 1]} : vector<8x128xf32> to vector<1x128xf32>
    %295 = vector.broadcast %293 : vector<8x1xf32> to vector<8x128xf32>
    %296 = vector.broadcast %294 : vector<1x128xf32> to vector<8x128xf32>
    %297 = arith.mulf %295, %296 : vector<8x128xf32>
    %298 = arith.addf %292, %297 : vector<8x128xf32>
    %299 = vector.extract_strided_slice %280 {offsets = [0, 3], sizes = [8, 1], strides = [1, 1]} : vector<8x8xf32> to vector<8x1xf32>
    %300 = vector.extract_strided_slice %220 {offsets = [3, 0], sizes = [1, 128], strides = [1, 1]} : vector<8x128xf32> to vector<1x128xf32>
    %301 = vector.broadcast %299 : vector<8x1xf32> to vector<8x128xf32>
    %302 = vector.broadcast %300 : vector<1x128xf32> to vector<8x128xf32>
    %303 = arith.mulf %301, %302 : vector<8x128xf32>
    %304 = arith.addf %298, %303 : vector<8x128xf32>
    %305 = vector.extract_strided_slice %280 {offsets = [0, 4], sizes = [8, 1], strides = [1, 1]} : vector<8x8xf32> to vector<8x1xf32>
    %306 = vector.extract_strided_slice %220 {offsets = [4, 0], sizes = [1, 128], strides = [1, 1]} : vector<8x128xf32> to vector<1x128xf32>
    %307 = vector.broadcast %305 : vector<8x1xf32> to vector<8x128xf32>
    %308 = vector.broadcast %306 : vector<1x128xf32> to vector<8x128xf32>
    %309 = arith.mulf %307, %308 : vector<8x128xf32>
    %310 = arith.addf %304, %309 : vector<8x128xf32>
    %311 = vector.extract_strided_slice %280 {offsets = [0, 5], sizes = [8, 1], strides = [1, 1]} : vector<8x8xf32> to vector<8x1xf32>
    %312 = vector.extract_strided_slice %220 {offsets = [5, 0], sizes = [1, 128], strides = [1, 1]} : vector<8x128xf32> to vector<1x128xf32>
    %313 = vector.broadcast %311 : vector<8x1xf32> to vector<8x128xf32>
    %314 = vector.broadcast %312 : vector<1x128xf32> to vector<8x128xf32>
    %315 = arith.mulf %313, %314 : vector<8x128xf32>
    %316 = arith.addf %310, %315 : vector<8x128xf32>
    %317 = vector.extract_strided_slice %280 {offsets = [0, 6], sizes = [8, 1], strides = [1, 1]} : vector<8x8xf32> to vector<8x1xf32>
    %318 = vector.extract_strided_slice %220 {offsets = [6, 0], sizes = [1, 128], strides = [1, 1]} : vector<8x128xf32> to vector<1x128xf32>
    %319 = vector.broadcast %317 : vector<8x1xf32> to vector<8x128xf32>
    %320 = vector.broadcast %318 : vector<1x128xf32> to vector<8x128xf32>
    %321 = arith.mulf %319, %320 : vector<8x128xf32>
    %322 = arith.addf %316, %321 : vector<8x128xf32>
    %323 = vector.extract_strided_slice %280 {offsets = [0, 7], sizes = [8, 1], strides = [1, 1]} : vector<8x8xf32> to vector<8x1xf32>
    %324 = vector.extract_strided_slice %220 {offsets = [7, 0], sizes = [1, 128], strides = [1, 1]} : vector<8x128xf32> to vector<1x128xf32>
    %325 = vector.broadcast %323 : vector<8x1xf32> to vector<8x128xf32>
    %326 = vector.broadcast %324 : vector<1x128xf32> to vector<8x128xf32>
    %327 = arith.mulf %325, %326 : vector<8x128xf32>
    %328 = arith.addf %322, %327 : vector<8x128xf32>
    %cst_26 = arith.constant 0.000000e+00 : f32
    %329 = vector.broadcast %cst_26 : f32 to vector<8x128xf32>
    %330 = arith.maximumf %328, %329 : vector<8x128xf32>
    %c104 = arith.constant 104 : index
    %c0_27 = arith.constant 0 : index
    %331 = vector.load %arg2[%c104, %c0_27] : memref<112x8xf32, #tpu.memory_space<vmem>>, vector<8x1xf32>
    %332 = vector.shape_cast %331 : vector<8x1xf32> to vector<8x1xf32>
    %333 = vector.broadcast %332 : vector<8x1xf32> to vector<8x128xf32>
    %c2_i32_28 = arith.constant 2 : i32
    %334 = vector.broadcast %c2_i32_28 : i32 to vector<1x128xi32>
    %335 = arith.cmpi sge, %16, %334 : vector<1x128xi32>
    %c2_i32_29 = arith.constant 2 : i32
    %336 = tpu.dynamic_rotate %330 by %c2_i32_29 dim 1 : vector<8x128xf32>, i32 -> vector<8x128xf32>
    %cst_30 = arith.constant 0.000000e+00 : f32
    %337 = vector.shape_cast %335 : vector<1x128xi1> to vector<1x128xi1>
    %338 = vector.broadcast %337 : vector<1x128xi1> to vector<8x128xi1>
    %339 = vector.broadcast %cst_30 : f32 to vector<8x128xf32>
    %340 = arith.select %338, %336, %339 : vector<8x128xi1>, vector<8x128xf32>
    %c88 = arith.constant 88 : index
    %c0_31 = arith.constant 0 : index
    %341 = vector.load %arg2[%c88, %c0_31] : memref<112x8xf32, #tpu.memory_space<vmem>>, vector<8x8xf32>
    %342 = vector.extract_strided_slice %341 {offsets = [0, 0], sizes = [8, 1], strides = [1, 1]} : vector<8x8xf32> to vector<8x1xf32>
    %343 = vector.extract_strided_slice %340 {offsets = [0, 0], sizes = [1, 128], strides = [1, 1]} : vector<8x128xf32> to vector<1x128xf32>
    %344 = vector.broadcast %342 : vector<8x1xf32> to vector<8x128xf32>
    %345 = vector.broadcast %343 : vector<1x128xf32> to vector<8x128xf32>
    %346 = arith.mulf %344, %345 : vector<8x128xf32>
    %347 = arith.addf %333, %346 : vector<8x128xf32>
    %348 = vector.extract_strided_slice %341 {offsets = [0, 1], sizes = [8, 1], strides = [1, 1]} : vector<8x8xf32> to vector<8x1xf32>
    %349 = vector.extract_strided_slice %340 {offsets = [1, 0], sizes = [1, 128], strides = [1, 1]} : vector<8x128xf32> to vector<1x128xf32>
    %350 = vector.broadcast %348 : vector<8x1xf32> to vector<8x128xf32>
    %351 = vector.broadcast %349 : vector<1x128xf32> to vector<8x128xf32>
    %352 = arith.mulf %350, %351 : vector<8x128xf32>
    %353 = arith.addf %347, %352 : vector<8x128xf32>
    %354 = vector.extract_strided_slice %341 {offsets = [0, 2], sizes = [8, 1], strides = [1, 1]} : vector<8x8xf32> to vector<8x1xf32>
    %355 = vector.extract_strided_slice %340 {offsets = [2, 0], sizes = [1, 128], strides = [1, 1]} : vector<8x128xf32> to vector<1x128xf32>
    %356 = vector.broadcast %354 : vector<8x1xf32> to vector<8x128xf32>
    %357 = vector.broadcast %355 : vector<1x128xf32> to vector<8x128xf32>
    %358 = arith.mulf %356, %357 : vector<8x128xf32>
    %359 = arith.addf %353, %358 : vector<8x128xf32>
    %360 = vector.extract_strided_slice %341 {offsets = [0, 3], sizes = [8, 1], strides = [1, 1]} : vector<8x8xf32> to vector<8x1xf32>
    %361 = vector.extract_strided_slice %340 {offsets = [3, 0], sizes = [1, 128], strides = [1, 1]} : vector<8x128xf32> to vector<1x128xf32>
    %362 = vector.broadcast %360 : vector<8x1xf32> to vector<8x128xf32>
    %363 = vector.broadcast %361 : vector<1x128xf32> to vector<8x128xf32>
    %364 = arith.mulf %362, %363 : vector<8x128xf32>
    %365 = arith.addf %359, %364 : vector<8x128xf32>
    %366 = vector.extract_strided_slice %341 {offsets = [0, 4], sizes = [8, 1], strides = [1, 1]} : vector<8x8xf32> to vector<8x1xf32>
    %367 = vector.extract_strided_slice %340 {offsets = [4, 0], sizes = [1, 128], strides = [1, 1]} : vector<8x128xf32> to vector<1x128xf32>
    %368 = vector.broadcast %366 : vector<8x1xf32> to vector<8x128xf32>
    %369 = vector.broadcast %367 : vector<1x128xf32> to vector<8x128xf32>
    %370 = arith.mulf %368, %369 : vector<8x128xf32>
    %371 = arith.addf %365, %370 : vector<8x128xf32>
    %372 = vector.extract_strided_slice %341 {offsets = [0, 5], sizes = [8, 1], strides = [1, 1]} : vector<8x8xf32> to vector<8x1xf32>
    %373 = vector.extract_strided_slice %340 {offsets = [5, 0], sizes = [1, 128], strides = [1, 1]} : vector<8x128xf32> to vector<1x128xf32>
    %374 = vector.broadcast %372 : vector<8x1xf32> to vector<8x128xf32>
    %375 = vector.broadcast %373 : vector<1x128xf32> to vector<8x128xf32>
    %376 = arith.mulf %374, %375 : vector<8x128xf32>
    %377 = arith.addf %371, %376 : vector<8x128xf32>
    %378 = vector.extract_strided_slice %341 {offsets = [0, 6], sizes = [8, 1], strides = [1, 1]} : vector<8x8xf32> to vector<8x1xf32>
    %379 = vector.extract_strided_slice %340 {offsets = [6, 0], sizes = [1, 128], strides = [1, 1]} : vector<8x128xf32> to vector<1x128xf32>
    %380 = vector.broadcast %378 : vector<8x1xf32> to vector<8x128xf32>
    %381 = vector.broadcast %379 : vector<1x128xf32> to vector<8x128xf32>
    %382 = arith.mulf %380, %381 : vector<8x128xf32>
    %383 = arith.addf %377, %382 : vector<8x128xf32>
    %384 = vector.extract_strided_slice %341 {offsets = [0, 7], sizes = [8, 1], strides = [1, 1]} : vector<8x8xf32> to vector<8x1xf32>
    %385 = vector.extract_strided_slice %340 {offsets = [7, 0], sizes = [1, 128], strides = [1, 1]} : vector<8x128xf32> to vector<1x128xf32>
    %386 = vector.broadcast %384 : vector<8x1xf32> to vector<8x128xf32>
    %387 = vector.broadcast %385 : vector<1x128xf32> to vector<8x128xf32>
    %388 = arith.mulf %386, %387 : vector<8x128xf32>
    %389 = arith.addf %383, %388 : vector<8x128xf32>
    %c96 = arith.constant 96 : index
    %c0_32 = arith.constant 0 : index
    %390 = vector.load %arg2[%c96, %c0_32] : memref<112x8xf32, #tpu.memory_space<vmem>>, vector<8x8xf32>
    %391 = vector.extract_strided_slice %390 {offsets = [0, 0], sizes = [8, 1], strides = [1, 1]} : vector<8x8xf32> to vector<8x1xf32>
    %392 = vector.extract_strided_slice %330 {offsets = [0, 0], sizes = [1, 128], strides = [1, 1]} : vector<8x128xf32> to vector<1x128xf32>
    %393 = vector.broadcast %391 : vector<8x1xf32> to vector<8x128xf32>
    %394 = vector.broadcast %392 : vector<1x128xf32> to vector<8x128xf32>
    %395 = arith.mulf %393, %394 : vector<8x128xf32>
    %396 = arith.addf %389, %395 : vector<8x128xf32>
    %397 = vector.extract_strided_slice %390 {offsets = [0, 1], sizes = [8, 1], strides = [1, 1]} : vector<8x8xf32> to vector<8x1xf32>
    %398 = vector.extract_strided_slice %330 {offsets = [1, 0], sizes = [1, 128], strides = [1, 1]} : vector<8x128xf32> to vector<1x128xf32>
    %399 = vector.broadcast %397 : vector<8x1xf32> to vector<8x128xf32>
    %400 = vector.broadcast %398 : vector<1x128xf32> to vector<8x128xf32>
    %401 = arith.mulf %399, %400 : vector<8x128xf32>
    %402 = arith.addf %396, %401 : vector<8x128xf32>
    %403 = vector.extract_strided_slice %390 {offsets = [0, 2], sizes = [8, 1], strides = [1, 1]} : vector<8x8xf32> to vector<8x1xf32>
    %404 = vector.extract_strided_slice %330 {offsets = [2, 0], sizes = [1, 128], strides = [1, 1]} : vector<8x128xf32> to vector<1x128xf32>
    %405 = vector.broadcast %403 : vector<8x1xf32> to vector<8x128xf32>
    %406 = vector.broadcast %404 : vector<1x128xf32> to vector<8x128xf32>
    %407 = arith.mulf %405, %406 : vector<8x128xf32>
    %408 = arith.addf %402, %407 : vector<8x128xf32>
    %409 = vector.extract_strided_slice %390 {offsets = [0, 3], sizes = [8, 1], strides = [1, 1]} : vector<8x8xf32> to vector<8x1xf32>
    %410 = vector.extract_strided_slice %330 {offsets = [3, 0], sizes = [1, 128], strides = [1, 1]} : vector<8x128xf32> to vector<1x128xf32>
    %411 = vector.broadcast %409 : vector<8x1xf32> to vector<8x128xf32>
    %412 = vector.broadcast %410 : vector<1x128xf32> to vector<8x128xf32>
    %413 = arith.mulf %411, %412 : vector<8x128xf32>
    %414 = arith.addf %408, %413 : vector<8x128xf32>
    %415 = vector.extract_strided_slice %390 {offsets = [0, 4], sizes = [8, 1], strides = [1, 1]} : vector<8x8xf32> to vector<8x1xf32>
    %416 = vector.extract_strided_slice %330 {offsets = [4, 0], sizes = [1, 128], strides = [1, 1]} : vector<8x128xf32> to vector<1x128xf32>
    %417 = vector.broadcast %415 : vector<8x1xf32> to vector<8x128xf32>
    %418 = vector.broadcast %416 : vector<1x128xf32> to vector<8x128xf32>
    %419 = arith.mulf %417, %418 : vector<8x128xf32>
    %420 = arith.addf %414, %419 : vector<8x128xf32>
    %421 = vector.extract_strided_slice %390 {offsets = [0, 5], sizes = [8, 1], strides = [1, 1]} : vector<8x8xf32> to vector<8x1xf32>
    %422 = vector.extract_strided_slice %330 {offsets = [5, 0], sizes = [1, 128], strides = [1, 1]} : vector<8x128xf32> to vector<1x128xf32>
    %423 = vector.broadcast %421 : vector<8x1xf32> to vector<8x128xf32>
    %424 = vector.broadcast %422 : vector<1x128xf32> to vector<8x128xf32>
    %425 = arith.mulf %423, %424 : vector<8x128xf32>
    %426 = arith.addf %420, %425 : vector<8x128xf32>
    %427 = vector.extract_strided_slice %390 {offsets = [0, 6], sizes = [8, 1], strides = [1, 1]} : vector<8x8xf32> to vector<8x1xf32>
    %428 = vector.extract_strided_slice %330 {offsets = [6, 0], sizes = [1, 128], strides = [1, 1]} : vector<8x128xf32> to vector<1x128xf32>
    %429 = vector.broadcast %427 : vector<8x1xf32> to vector<8x128xf32>
    %430 = vector.broadcast %428 : vector<1x128xf32> to vector<8x128xf32>
    %431 = arith.mulf %429, %430 : vector<8x128xf32>
    %432 = arith.addf %426, %431 : vector<8x128xf32>
    %433 = vector.extract_strided_slice %390 {offsets = [0, 7], sizes = [8, 1], strides = [1, 1]} : vector<8x8xf32> to vector<8x1xf32>
    %434 = vector.extract_strided_slice %330 {offsets = [7, 0], sizes = [1, 128], strides = [1, 1]} : vector<8x128xf32> to vector<1x128xf32>
    %435 = vector.broadcast %433 : vector<8x1xf32> to vector<8x128xf32>
    %436 = vector.broadcast %434 : vector<1x128xf32> to vector<8x128xf32>
    %437 = arith.mulf %435, %436 : vector<8x128xf32>
    %438 = arith.addf %432, %437 : vector<8x128xf32>
    %cst_33 = arith.constant 0.000000e+00 : f32
    %439 = vector.broadcast %cst_33 : f32 to vector<8x128xf32>
    %440 = arith.maximumf %438, %439 : vector<8x128xf32>
    %441 = arith.addf %440, %220 : vector<8x128xf32>
    %cst_34 = arith.constant 0.000000e+00 : f32
    %442 = vector.broadcast %cst_34 : f32 to vector<8x128xf32>
    %443 = arith.maximumf %441, %442 : vector<8x128xf32>
    %c0_35 = arith.constant 0 : index
    %c0_36 = arith.constant 0 : index
    %444 = vector.load %arg3[%c0_35, %c0_36] : memref<8x128xf32, #tpu.memory_space<vmem>>, vector<8x128xf32>
    tpu.vector_store %arg3[%c0_35, %c0_36], %443 {strides = array<i32>} : memref<8x128xf32, #tpu.memory_space<vmem>>, vector<8x128xf32>,
    return
  }
  func.func @transform_0(%arg0: i32) -> (i32, i32) {
    %c0_i32 = arith.constant 0 : i32
    %c0_i32_0 = arith.constant 0 : i32
    return %c0_i32, %arg0 : i32, i32
  }
  func.func @transform_1(%arg0: i32) -> (i32, i32) {
    %c0_i32 = arith.constant 0 : i32
    %c0_i32_0 = arith.constant 0 : i32
    %c0_i32_1 = arith.constant 0 : i32
    return %c0_i32, %c0_i32_0 : i32, i32
  }
  func.func @transform_2(%arg0: i32) -> (i32, i32) {
    %c0_i32 = arith.constant 0 : i32
    %c0_i32_0 = arith.constant 0 : i32
    return %c0_i32, %arg0 : i32, i32
  }
}

</mosaic_0001>

<llo_original>
// kernel: tpu_custom_call.1
$region0: #{tpu_custom_call.1}
  #allocation0 [shape = 'u32[]', space=smem, size = 0x4, offset = 0x4, fixed_abs, tag = 'smem constant byte address 0x4 - core index']
  #allocation1 [shape = 'u32[144,128]{1,0:T(1,128)}', space=vmem, size = 0x12000, scoped, tag = 'internal scratch']
  %s0 = inlined_call_operand.vmem [shape: f32[4,128], index: 0, kind: input, shape index: {}]
  %s1 = inlined_call_operand.vmem [shape: f32[112,8], index: 1, kind: input, shape index: {}]
  %s2 = inlined_call_operand.hbm [shape: f32[8,128], index: 2, kind: output, shape index: {}]
  %s3 = sld [smem:[#allocation0]]
  $region18: #{tpu_custom_call.1} parent=0
    _
  %s5 = ssub.s32 1, %s3
  %s6 = scalar_select 0, %s5, %s3
  $region1: #{tpu_custom_call.1} parent=0
    #allocation2 [shape = 'u8[4096]{0}', space=vmem, size = 0x1000, scoped, tag = 'output window, operand 0, single buffered']
    #allocation3 [shape = 's32[1]{0}', space=sflag, size = 0x4, scoped, tag = 'scoped memory for tpu_custom_call.1']
    %7 = vsyncpa [#allocation3], 0
    // Predicated region
    $region2: #{tpu_custom_call.1} parent=1 // pred_check
      _
    $region3: #{tpu_custom_call.1} parent=1 // pred_check_branch
      %9 = sbr.rel (0) target = $region5
    $region4: #{tpu_custom_call.1} parent=1 // pred_region
      _
    $region5: #{tpu_custom_call.1} parent=1 // pred_fallthru
      _
    // Predicated region
    $region6: #{tpu_custom_call.1} parent=1 // pred_check
      _
    $region7: #{tpu_custom_call.1} parent=1 // pred_check_branch
      %11 = sbr.rel (0) target = $region9
    $region8: #{tpu_custom_call.1} parent=1 // pred_region
      _
    $region9: #{tpu_custom_call.1} parent=1 // pred_fallthru
      _
    %v12 = vlaneseq
    %v13 = vand.u32 %v12, 127
    %vm14 = vcmp.lt.s32.totalorder %v13, 0
    %v15 = vsub.s32 0, %v13
    %v16 = vsel %vm14, %v15, %v13
    %v17 = vshrl.u32 %v16, 4
    %v18 = vand.u32 %v16, 15
    %v19 = vsub.s32 0, %v18
    %v20 = vsel %vm14, %v19, %v18
    %vm21 = vcmp.ne.s32.totalorder %v20, 0
    %vm22 = vcmp.lt.s32.totalorder %v20, 0
    %vm23 = vmand %vm22, %vm21
    %v24 = vadd.s32 %v20, 16
    %v25 = vsel %vm23, %v24, %v20
    %v26 = vld [vmem:[%s0] sm:$0xf]
    %v27 = vld [vmem:[%s1 + $0x10] sm:$0xff]
    %29 = vset.pattern.permute.xlu0 0
    %30 = vperm.xlu0 %29, %v27
    %v31 = vpop.permute.xlu0 %30
    %vm33 = vcmp.ge.s32.totalorder %v25, 1
    %34 = vrot.lane.b32.xlu0 %v26, 1
    %v35 = vpop.permute.xlu0 %34
    %v36 = vsel %vm33, 1, 0
    %vm37 = vcmp.eq.s32.totalorder %v36, 1
    %v38 = vsel %vm37, %v35, 0.0
    %v39 = vld [vmem:[%s1] sm:$0xff]
    %41 = vset.pattern.permute.xlu0 0
    %42 = vperm.xlu0 %41, %v39
    %v43 = vpop.permute.xlu0 %42
    %v45 = vlaneseq
    %v46 = vshrl.u32 %v45, 7
    %v47 = vsub.s32 0, %v46
    %v48 = vrot.slane %v38, %v47
    %v49 = vmul.f32 %v43, %v48
    %v50 = vadd.f32 %v31, %v49
    %51 = vset.pattern.permute.xlu0 1
    %52 = vperm.xlu0 %51, %v39
    %v53 = vpop.permute.xlu0 %52
    %v55 = vlaneseq
    %v56 = vshrl.u32 %v55, 7
    %v57 = vsub.s32 1, %v56
    %v58 = vrot.slane %v38, %v57
    %v59 = vmul.f32 %v53, %v58
    %v60 = vadd.f32 %v50, %v59
    %61 = vset.pattern.permute.xlu0 2
    %62 = vperm.xlu0 %61, %v39
    %v63 = vpop.permute.xlu0 %62
    %v65 = vlaneseq
    %v66 = vshrl.u32 %v65, 7
    %v67 = vsub.s32 2, %v66
    %v68 = vrot.slane %v38, %v67
    %v69 = vmul.f32 %v63, %v68
    %v70 = vadd.f32 %v60, %v69
    %71 = vset.pattern.permute.xlu0 3
    %72 = vperm.xlu0 %71, %v39
    %v73 = vpop.permute.xlu0 %72
    %v75 = vlaneseq
    %v76 = vshrl.u32 %v75, 7
    %v77 = vsub.s32 3, %v76
    %v78 = vrot.slane %v38, %v77
    %v79 = vmul.f32 %v73, %v78
    %v80 = vadd.f32 %v70, %v79
    %v81 = vld [vmem:[%s1 + $0x8] sm:$0xff]
    %83 = vset.pattern.permute.xlu0 0
    %84 = vperm.xlu0 %83, %v81
    %v85 = vpop.permute.xlu0 %84
    %v87 = vlaneseq
    %v88 = vshrl.u32 %v87, 7
    %v89 = vsub.s32 0, %v88
    %v90 = vrot.slane %v26, %v89
    %v91 = vmul.f32 %v85, %v90
    %v92 = vadd.f32 %v80, %v91
    %93 = vset.pattern.permute.xlu0 1
    %94 = vperm.xlu0 %93, %v81
    %v95 = vpop.permute.xlu0 %94
    %v97 = vlaneseq
    %v98 = vshrl.u32 %v97, 7
    %v99 = vsub.s32 1, %v98
    %v100 = vrot.slane %v26, %v99
    %v101 = vmul.f32 %v95, %v100
    %v102 = vadd.f32 %v92, %v101
    %103 = vset.pattern.permute.xlu0 2
    %104 = vperm.xlu0 %103, %v81
    %v105 = vpop.permute.xlu0 %104
    %v107 = vlaneseq
    %v108 = vshrl.u32 %v107, 7
    %v109 = vsub.s32 2, %v108
    %v110 = vrot.slane %v26, %v109
    %v111 = vmul.f32 %v105, %v110
    %v112 = vadd.f32 %v102, %v111
    %113 = vset.pattern.permute.xlu0 3
    %114 = vperm.xlu0 %113, %v81
    %v115 = vpop.permute.xlu0 %114
    %v117 = vlaneseq
    %v118 = vshrl.u32 %v117, 7
    %v119 = vsub.s32 3, %v118
    %v120 = vrot.slane %v26, %v119
    %v121 = vmul.f32 %v115, %v120
    %v122 = vadd.f32 %v112, %v121
    %v123 = vmax.f32 %v122, 0.0
    %v124 = vld [vmem:[%s1 + $0x28] sm:$0xff]
    %126 = vset.pattern.permute.xlu0 0
    %127 = vperm.xlu0 %126, %v124
    %v128 = vpop.permute.xlu0 %127
    %130 = vrot.lane.b32.xlu0 %v123, 1
    %v131 = vpop.permute.xlu0 %130
    %v132 = vsel %vm37, %v131, 0.0
    %v133 = vld [vmem:[%s1 + $0x18] sm:$0xff]
    %135 = vset.pattern.permute.xlu0 0
    %136 = vperm.xlu0 %135, %v133
    %v137 = vpop.permute.xlu0 %136
    %v139 = vlaneseq
    %v140 = vshrl.u32 %v139, 7
    %v141 = vsub.s32 0, %v140
    %v142 = vrot.slane %v132, %v141
    %v143 = vmul.f32 %v137, %v142
    %v144 = vadd.f32 %v128, %v143
    %145 = vset.pattern.permute.xlu0 1
    %146 = vperm.xlu0 %145, %v133
    %v147 = vpop.permute.xlu0 %146
    %v149 = vlaneseq
    %v150 = vshrl.u32 %v149, 7
    %v151 = vsub.s32 1, %v150
    %v152 = vrot.slane %v132, %v151
    %v153 = vmul.f32 %v147, %v152
    %v154 = vadd.f32 %v144, %v153
    %155 = vset.pattern.permute.xlu0 2
    %156 = vperm.xlu0 %155, %v133
    %v157 = vpop.permute.xlu0 %156
    %v159 = vlaneseq
    %v160 = vshrl.u32 %v159, 7
    %v161 = vsub.s32 2, %v160
    %v162 = vrot.slane %v132, %v161
    %v163 = vmul.f32 %v157, %v162
    %v164 = vadd.f32 %v154, %v163
    %165 = vset.pattern.permute.xlu0 3
    %166 = vperm.xlu0 %165, %v133
    %v167 = vpop.permute.xlu0 %166
    %v169 = vlaneseq
    %v170 = vshrl.u32 %v169, 7
    %v171 = vsub.s32 3, %v170
    %v172 = vrot.slane %v132, %v171
    %v173 = vmul.f32 %v167, %v172
    %v174 = vadd.f32 %v164, %v173
    %175 = vset.pattern.permute.xlu0 4
    %176 = vperm.xlu0 %175, %v133
    %v177 = vpop.permute.xlu0 %176
    %v179 = vlaneseq
    %v180 = vshrl.u32 %v179, 7
    %v181 = vsub.s32 4, %v180
    %v182 = vrot.slane %v132, %v181
    %v183 = vmul.f32 %v177, %v182
    %v184 = vadd.f32 %v174, %v183
    %185 = vset.pattern.permute.xlu0 5
    %186 = vperm.xlu0 %185, %v133
    %v187 = vpop.permute.xlu0 %186
    %v189 = vlaneseq
    %v190 = vshrl.u32 %v189, 7
    %v191 = vsub.s32 5, %v190
    %v192 = vrot.slane %v132, %v191
    %v193 = vmul.f32 %v187, %v192
    %v194 = vadd.f32 %v184, %v193
    %195 = vset.pattern.permute.xlu0 6
    %196 = vperm.xlu0 %195, %v133
    %v197 = vpop.permute.xlu0 %196
    %v199 = vlaneseq
    %v200 = vshrl.u32 %v199, 7
    %v201 = vsub.s32 6, %v200
    %v202 = vrot.slane %v132, %v201
    %v203 = vmul.f32 %v197, %v202
    %v204 = vadd.f32 %v194, %v203
    %205 = vset.pattern.permute.xlu0 7
    %206 = vperm.xlu0 %205, %v133
    %v207 = vpop.permute.xlu0 %206
    %v209 = vlaneseq
    %v210 = vshrl.u32 %v209, 7
    %v211 = vsub.s32 7, %v210
    %v212 = vrot.slane %v132, %v211
    %v213 = vmul.f32 %v207, %v212
    %v214 = vadd.f32 %v204, %v213
    %v215 = vld [vmem:[%s1 + $0x20] sm:$0xff]
    %217 = vset.pattern.permute.xlu0 0
    %218 = vperm.xlu0 %217, %v215
    %v219 = vpop.permute.xlu0 %218
    %v221 = vlaneseq
    %v222 = vshrl.u32 %v221, 7
    %v223 = vsub.s32 0, %v222
    %v224 = vrot.slane %v123, %v223
    %v225 = vmul.f32 %v219, %v224
    %v226 = vadd.f32 %v214, %v225
    %227 = vset.pattern.permute.xlu0 1
    %228 = vperm.xlu0 %227, %v215
    %v229 = vpop.permute.xlu0 %228
    %v231 = vlaneseq
    %v232 = vshrl.u32 %v231, 7
    %v233 = vsub.s32 1, %v232
    %v234 = vrot.slane %v123, %v233
    %v235 = vmul.f32 %v229, %v234
    %v236 = vadd.f32 %v226, %v235
    %237 = vset.pattern.permute.xlu0 2
    %238 = vperm.xlu0 %237, %v215
    %v239 = vpop.permute.xlu0 %238
    %v241 = vlaneseq
    %v242 = vshrl.u32 %v241, 7
    %v243 = vsub.s32 2, %v242
    %v244 = vrot.slane %v123, %v243
    %v245 = vmul.f32 %v239, %v244
    %v246 = vadd.f32 %v236, %v245
    %247 = vset.pattern.permute.xlu0 3
    %248 = vperm.xlu0 %247, %v215
    %v249 = vpop.permute.xlu0 %248
    %v251 = vlaneseq
    %v252 = vshrl.u32 %v251, 7
    %v253 = vsub.s32 3, %v252
    %v254 = vrot.slane %v123, %v253
    %v255 = vmul.f32 %v249, %v254
    %v256 = vadd.f32 %v246, %v255
    %257 = vset.pattern.permute.xlu0 4
    %258 = vperm.xlu0 %257, %v215
    %v259 = vpop.permute.xlu0 %258
    %v261 = vlaneseq
    %v262 = vshrl.u32 %v261, 7
    %v263 = vsub.s32 4, %v262
    %v264 = vrot.slane %v123, %v263
    %v265 = vmul.f32 %v259, %v264
    %v266 = vadd.f32 %v256, %v265
    %267 = vset.pattern.permute.xlu0 5
    %268 = vperm.xlu0 %267, %v215
    %v269 = vpop.permute.xlu0 %268
    %v271 = vlaneseq
    %v272 = vshrl.u32 %v271, 7
    %v273 = vsub.s32 5, %v272
    %v274 = vrot.slane %v123, %v273
    %v275 = vmul.f32 %v269, %v274
    %v276 = vadd.f32 %v266, %v275
    %277 = vset.pattern.permute.xlu0 6
    %278 = vperm.xlu0 %277, %v215
    %v279 = vpop.permute.xlu0 %278
    %v281 = vlaneseq
    %v282 = vshrl.u32 %v281, 7
    %v283 = vsub.s32 6, %v282
    %v284 = vrot.slane %v123, %v283
    %v285 = vmul.f32 %v279, %v284
    %v286 = vadd.f32 %v276, %v285
    %287 = vset.pattern.permute.xlu0 7
    %288 = vperm.xlu0 %287, %v215
    %v289 = vpop.permute.xlu0 %288
    %v291 = vlaneseq
    %v292 = vshrl.u32 %v291, 7
    %v293 = vsub.s32 7, %v292
    %v294 = vrot.slane %v123, %v293
    %v295 = vmul.f32 %v289, %v294
    %v296 = vadd.f32 %v286, %v295
    %v297 = vmax.f32 %v296, 0.0
    %v298 = vld [vmem:[%s1 + $0x38] sm:$0xff]
    %300 = vset.pattern.permute.xlu0 0
    %301 = vperm.xlu0 %300, %v298
    %v302 = vpop.permute.xlu0 %301
    %v304 = vld [vmem:[%s1 + $0x30] sm:$0xff]
    %306 = vset.pattern.permute.xlu0 0
    %307 = vperm.xlu0 %306, %v304
    %v308 = vpop.permute.xlu0 %307
    %v310 = vmul.f32 %v308, %v90
    %v311 = vadd.f32 %v302, %v310
    %312 = vset.pattern.permute.xlu0 1
    %313 = vperm.xlu0 %312, %v304
    %v314 = vpop.permute.xlu0 %313
    %v316 = vmul.f32 %v314, %v100
    %v317 = vadd.f32 %v311, %v316
    %318 = vset.pattern.permute.xlu0 2
    %319 = vperm.xlu0 %318, %v304
    %v320 = vpop.permute.xlu0 %319
    %v322 = vmul.f32 %v320, %v110
    %v323 = vadd.f32 %v317, %v322
    %324 = vset.pattern.permute.xlu0 3
    %325 = vperm.xlu0 %324, %v304
    %v326 = vpop.permute.xlu0 %325
    %v328 = vmul.f32 %v326, %v120
    %v329 = vadd.f32 %v323, %v328
    %v330 = vadd.f32 %v297, %v329
    %v331 = vmax.f32 %v330, 0.0
    %v332 = vld [vmem:[%s1 + $0x50] sm:$0xff]
    %334 = vset.pattern.permute.xlu0 0
    %335 = vperm.xlu0 %334, %v332
    %v336 = vpop.permute.xlu0 %335
    %vm338 = vcmp.ge.s32.totalorder %v25, 2
    %339 = vrot.lane.b32.xlu0 %v331, 2
    %v340 = vpop.permute.xlu0 %339
    %v341 = vsel %vm338, 1, 0
    %vm342 = vcmp.eq.s32.totalorder %v341, 1
    %v343 = vsel %vm342, %v340, 0.0
    %v344 = vld [vmem:[%s1 + $0x40] sm:$0xff]
    %346 = vset.pattern.permute.xlu0 0
    %347 = vperm.xlu0 %346, %v344
    %v348 = vpop.permute.xlu0 %347
    %v350 = vlaneseq
    %v351 = vshrl.u32 %v350, 7
    %v352 = vsub.s32 0, %v351
    %v353 = vrot.slane %v343, %v352
    %v354 = vmul.f32 %v348, %v353
    %v355 = vadd.f32 %v336, %v354
    %356 = vset.pattern.permute.xlu0 1
    %357 = vperm.xlu0 %356, %v344
    %v358 = vpop.permute.xlu0 %357
    %v360 = vlaneseq
    %v361 = vshrl.u32 %v360, 7
    %v362 = vsub.s32 1, %v361
    %v363 = vrot.slane %v343, %v362
    %v364 = vmul.f32 %v358, %v363
    %v365 = vadd.f32 %v355, %v364
    %366 = vset.pattern.permute.xlu0 2
    %367 = vperm.xlu0 %366, %v344
    %v368 = vpop.permute.xlu0 %367
    %v370 = vlaneseq
    %v371 = vshrl.u32 %v370, 7
    %v372 = vsub.s32 2, %v371
    %v373 = vrot.slane %v343, %v372
    %v374 = vmul.f32 %v368, %v373
    %v375 = vadd.f32 %v365, %v374
    %376 = vset.pattern.permute.xlu0 3
    %377 = vperm.xlu0 %376, %v344
    %v378 = vpop.permute.xlu0 %377
    %v380 = vlaneseq
    %v381 = vshrl.u32 %v380, 7
    %v382 = vsub.s32 3, %v381
    %v383 = vrot.slane %v343, %v382
    %v384 = vmul.f32 %v378, %v383
    %v385 = vadd.f32 %v375, %v384
    %386 = vset.pattern.permute.xlu0 4
    %387 = vperm.xlu0 %386, %v344
    %v388 = vpop.permute.xlu0 %387
    %v390 = vlaneseq
    %v391 = vshrl.u32 %v390, 7
    %v392 = vsub.s32 4, %v391
    %v393 = vrot.slane %v343, %v392
    %v394 = vmul.f32 %v388, %v393
    %v395 = vadd.f32 %v385, %v394
    %396 = vset.pattern.permute.xlu0 5
    %397 = vperm.xlu0 %396, %v344
    %v398 = vpop.permute.xlu0 %397
    %v400 = vlaneseq
    %v401 = vshrl.u32 %v400, 7
    %v402 = vsub.s32 5, %v401
    %v403 = vrot.slane %v343, %v402
    %v404 = vmul.f32 %v398, %v403
    %v405 = vadd.f32 %v395, %v404
    %406 = vset.pattern.permute.xlu0 6
    %407 = vperm.xlu0 %406, %v344
    %v408 = vpop.permute.xlu0 %407
    %v410 = vlaneseq
    %v411 = vshrl.u32 %v410, 7
    %v412 = vsub.s32 6, %v411
    %v413 = vrot.slane %v343, %v412
    %v414 = vmul.f32 %v408, %v413
    %v415 = vadd.f32 %v405, %v414
    %416 = vset.pattern.permute.xlu0 7
    %417 = vperm.xlu0 %416, %v344
    %v418 = vpop.permute.xlu0 %417
    %v420 = vlaneseq
    %v421 = vshrl.u32 %v420, 7
    %v422 = vsub.s32 7, %v421
    %v423 = vrot.slane %v343, %v422
    %v424 = vmul.f32 %v418, %v423
    %v425 = vadd.f32 %v415, %v424
    %v426 = vld [vmem:[%s1 + $0x48] sm:$0xff]
    %428 = vset.pattern.permute.xlu0 0
    %429 = vperm.xlu0 %428, %v426
    %v430 = vpop.permute.xlu0 %429
    %v432 = vlaneseq
    %v433 = vshrl.u32 %v432, 7
    %v434 = vsub.s32 0, %v433
    %v435 = vrot.slane %v331, %v434
    %v436 = vmul.f32 %v430, %v435
    %v437 = vadd.f32 %v425, %v436
    %438 = vset.pattern.permute.xlu0 1
    %439 = vperm.xlu0 %438, %v426
    %v440 = vpop.permute.xlu0 %439
    %v442 = vlaneseq
    %v443 = vshrl.u32 %v442, 7
    %v444 = vsub.s32 1, %v443
    %v445 = vrot.slane %v331, %v444
    %v446 = vmul.f32 %v440, %v445
    %v447 = vadd.f32 %v437, %v446
    %448 = vset.pattern.permute.xlu0 2
    %449 = vperm.xlu0 %448, %v426
    %v450 = vpop.permute.xlu0 %449
    %v452 = vlaneseq
    %v453 = vshrl.u32 %v452, 7
    %v454 = vsub.s32 2, %v453
    %v455 = vrot.slane %v331, %v454
    %v456 = vmul.f32 %v450, %v455
    %v457 = vadd.f32 %v447, %v456
    %458 = vset.pattern.permute.xlu0 3
    %459 = vperm.xlu0 %458, %v426
    %v460 = vpop.permute.xlu0 %459
    %v462 = vlaneseq
    %v463 = vshrl.u32 %v462, 7
    %v464 = vsub.s32 3, %v463
    %v465 = vrot.slane %v331, %v464
    %v466 = vmul.f32 %v460, %v465
    %v467 = vadd.f32 %v457, %v466
    %468 = vset.pattern.permute.xlu0 4
    %469 = vperm.xlu0 %468, %v426
    %v470 = vpop.permute.xlu0 %469
    %v472 = vlaneseq
    %v473 = vshrl.u32 %v472, 7
    %v474 = vsub.s32 4, %v473
    %v475 = vrot.slane %v331, %v474
    %v476 = vmul.f32 %v470, %v475
    %v477 = vadd.f32 %v467, %v476
    %478 = vset.pattern.permute.xlu0 5
    %479 = vperm.xlu0 %478, %v426
    %v480 = vpop.permute.xlu0 %479
    %v482 = vlaneseq
    %v483 = vshrl.u32 %v482, 7
    %v484 = vsub.s32 5, %v483
    %v485 = vrot.slane %v331, %v484
    %v486 = vmul.f32 %v480, %v485
    %v487 = vadd.f32 %v477, %v486
    %488 = vset.pattern.permute.xlu0 6
    %489 = vperm.xlu0 %488, %v426
    %v490 = vpop.permute.xlu0 %489
    %v492 = vlaneseq
    %v493 = vshrl.u32 %v492, 7
    %v494 = vsub.s32 6, %v493
    %v495 = vrot.slane %v331, %v494
    %v496 = vmul.f32 %v490, %v495
    %v497 = vadd.f32 %v487, %v496
    %498 = vset.pattern.permute.xlu0 7
    %499 = vperm.xlu0 %498, %v426
    %v500 = vpop.permute.xlu0 %499
    %v502 = vlaneseq
    %v503 = vshrl.u32 %v502, 7
    %v504 = vsub.s32 7, %v503
    %v505 = vrot.slane %v331, %v504
    %v506 = vmul.f32 %v500, %v505
    %v507 = vadd.f32 %v497, %v506
    %v508 = vmax.f32 %v507, 0.0
    %v509 = vld [vmem:[%s1 + $0x68] sm:$0xff]
    %511 = vset.pattern.permute.xlu0 0
    %512 = vperm.xlu0 %511, %v509
    %v513 = vpop.permute.xlu0 %512
    %515 = vrot.lane.b32.xlu0 %v508, 2
    %v516 = vpop.permute.xlu0 %515
    %v517 = vsel %vm342, %v516, 0.0
    %v518 = vld [vmem:[%s1 + $0x58] sm:$0xff]
    %520 = vset.pattern.permute.xlu0 0
    %521 = vperm.xlu0 %520, %v518
    %v522 = vpop.permute.xlu0 %521
    %v524 = vlaneseq
    %v525 = vshrl.u32 %v524, 7
    %v526 = vsub.s32 0, %v525
    %v527 = vrot.slane %v517, %v526
    %v528 = vmul.f32 %v522, %v527
    %v529 = vadd.f32 %v513, %v528
    %530 = vset.pattern.permute.xlu0 1
    %531 = vperm.xlu0 %530, %v518
    %v532 = vpop.permute.xlu0 %531
    %v534 = vlaneseq
    %v535 = vshrl.u32 %v534, 7
    %v536 = vsub.s32 1, %v535
    %v537 = vrot.slane %v517, %v536
    %v538 = vmul.f32 %v532, %v537
    %v539 = vadd.f32 %v529, %v538
    %540 = vset.pattern.permute.xlu0 2
    %541 = vperm.xlu0 %540, %v518
    %v542 = vpop.permute.xlu0 %541
    %v544 = vlaneseq
    %v545 = vshrl.u32 %v544, 7
    %v546 = vsub.s32 2, %v545
    %v547 = vrot.slane %v517, %v546
    %v548 = vmul.f32 %v542, %v547
    %v549 = vadd.f32 %v539, %v548
    %550 = vset.pattern.permute.xlu0 3
    %551 = vperm.xlu0 %550, %v518
    %v552 = vpop.permute.xlu0 %551
    %v554 = vlaneseq
    %v555 = vshrl.u32 %v554, 7
    %v556 = vsub.s32 3, %v555
    %v557 = vrot.slane %v517, %v556
    %v558 = vmul.f32 %v552, %v557
    %v559 = vadd.f32 %v549, %v558
    %560 = vset.pattern.permute.xlu0 4
    %561 = vperm.xlu0 %560, %v518
    %v562 = vpop.permute.xlu0 %561
    %v564 = vlaneseq
    %v565 = vshrl.u32 %v564, 7
    %v566 = vsub.s32 4, %v565
    %v567 = vrot.slane %v517, %v566
    %v568 = vmul.f32 %v562, %v567
    %v569 = vadd.f32 %v559, %v568
    %570 = vset.pattern.permute.xlu0 5
    %571 = vperm.xlu0 %570, %v518
    %v572 = vpop.permute.xlu0 %571
    %v574 = vlaneseq
    %v575 = vshrl.u32 %v574, 7
    %v576 = vsub.s32 5, %v575
    %v577 = vrot.slane %v517, %v576
    %v578 = vmul.f32 %v572, %v577
    %v579 = vadd.f32 %v569, %v578
    %580 = vset.pattern.permute.xlu0 6
    %581 = vperm.xlu0 %580, %v518
    %v582 = vpop.permute.xlu0 %581
    %v584 = vlaneseq
    %v585 = vshrl.u32 %v584, 7
    %v586 = vsub.s32 6, %v585
    %v587 = vrot.slane %v517, %v586
    %v588 = vmul.f32 %v582, %v587
    %v589 = vadd.f32 %v579, %v588
    %590 = vset.pattern.permute.xlu0 7
    %591 = vperm.xlu0 %590, %v518
    %v592 = vpop.permute.xlu0 %591
    %v594 = vlaneseq
    %v595 = vshrl.u32 %v594, 7
    %v596 = vsub.s32 7, %v595
    %v597 = vrot.slane %v517, %v596
    %v598 = vmul.f32 %v592, %v597
    %v599 = vadd.f32 %v589, %v598
    %v600 = vld [vmem:[%s1 + $0x60] sm:$0xff]
    %602 = vset.pattern.permute.xlu0 0
    %603 = vperm.xlu0 %602, %v600
    %v604 = vpop.permute.xlu0 %603
    %v606 = vlaneseq
    %v607 = vshrl.u32 %v606, 7
    %v608 = vsub.s32 0, %v607
    %v609 = vrot.slane %v508, %v608
    %v610 = vmul.f32 %v604, %v609
    %v611 = vadd.f32 %v599, %v610
    %612 = vset.pattern.permute.xlu0 1
    %613 = vperm.xlu0 %612, %v600
    %v614 = vpop.permute.xlu0 %613
    %v616 = vlaneseq
    %v617 = vshrl.u32 %v616, 7
    %v618 = vsub.s32 1, %v617
    %v619 = vrot.slane %v508, %v618
    %v620 = vmul.f32 %v614, %v619
    %v621 = vadd.f32 %v611, %v620
    %622 = vset.pattern.permute.xlu0 2
    %623 = vperm.xlu0 %622, %v600
    %v624 = vpop.permute.xlu0 %623
    %v626 = vlaneseq
    %v627 = vshrl.u32 %v626, 7
    %v628 = vsub.s32 2, %v627
    %v629 = vrot.slane %v508, %v628
    %v630 = vmul.f32 %v624, %v629
    %v631 = vadd.f32 %v621, %v630
    %632 = vset.pattern.permute.xlu0 3
    %633 = vperm.xlu0 %632, %v600
    %v634 = vpop.permute.xlu0 %633
    %v636 = vlaneseq
    %v637 = vshrl.u32 %v636, 7
    %v638 = vsub.s32 3, %v637
    %v639 = vrot.slane %v508, %v638
    %v640 = vmul.f32 %v634, %v639
    %v641 = vadd.f32 %v631, %v640
    %642 = vset.pattern.permute.xlu0 4
    %643 = vperm.xlu0 %642, %v600
    %v644 = vpop.permute.xlu0 %643
    %v646 = vlaneseq
    %v647 = vshrl.u32 %v646, 7
    %v648 = vsub.s32 4, %v647
    %v649 = vrot.slane %v508, %v648
    %v650 = vmul.f32 %v644, %v649
    %v651 = vadd.f32 %v641, %v650
    %652 = vset.pattern.permute.xlu0 5
    %653 = vperm.xlu0 %652, %v600
    %v654 = vpop.permute.xlu0 %653
    %v656 = vlaneseq
    %v657 = vshrl.u32 %v656, 7
    %v658 = vsub.s32 5, %v657
    %v659 = vrot.slane %v508, %v658
    %v660 = vmul.f32 %v654, %v659
    %v661 = vadd.f32 %v651, %v660
    %662 = vset.pattern.permute.xlu0 6
    %663 = vperm.xlu0 %662, %v600
    %v664 = vpop.permute.xlu0 %663
    %v666 = vlaneseq
    %v667 = vshrl.u32 %v666, 7
    %v668 = vsub.s32 6, %v667
    %v669 = vrot.slane %v508, %v668
    %v670 = vmul.f32 %v664, %v669
    %v671 = vadd.f32 %v661, %v670
    %672 = vset.pattern.permute.xlu0 7
    %673 = vperm.xlu0 %672, %v600
    %v674 = vpop.permute.xlu0 %673
    %v676 = vlaneseq
    %v677 = vshrl.u32 %v676, 7
    %v678 = vsub.s32 7, %v677
    %v679 = vrot.slane %v508, %v678
    %v680 = vmul.f32 %v674, %v679
    %v681 = vadd.f32 %v671, %v680
    %v682 = vmax.f32 %v681, 0.0
    %v683 = vadd.f32 %v682, %v331
    %v684 = vmax.f32 %v683, 0.0
    %685 = vst [vmem:[#allocation2] sm:$0xff] %v684
    // Predicated region
    $region10: #{tpu_custom_call.1} parent=1 // pred_check
      _
    $region11: #{tpu_custom_call.1} parent=1 // pred_check_branch
      %687 = sbr.rel (0) target = $region13
    $region12: #{tpu_custom_call.1} parent=1 // pred_region
      %s689 = ssub.s32 128, 128
      %690 = vsyncadd [#allocation3], %s689
      %s692 = sshll.u32 [#allocation2], 4
      %s693 = int_to_ptr.vmem [resolvable:$true] %s692
      %695 = dma.vmem_to_hbm [thread:$0]  %s693, 128, %s2, [#allocation3]
    $region13: #{tpu_custom_call.1} parent=1 // pred_fallthru
      _
    // Predicated region
    $region14: #{tpu_custom_call.1} parent=1 // pred_check
      _
    $region15: #{tpu_custom_call.1} parent=1 // pred_check_branch
      %697 = sbr.rel (0) target = $region17
    $region16: #{tpu_custom_call.1} parent=1 // pred_region
      %698 = dma.done [#allocation3], 128
    $region17: #{tpu_custom_call.1} parent=1 // pred_fallthru
      _
    %699 = vsyncpa [#allocation3], 1

</llo_original>
